<compile_context>
chip_gen: v5e
topology: v5e:2x2
jax: 0.10.0
libtpu: 0.0.40
codegen_flags: <defaults>
</compile_context>

<pallas_src>
import functools

import jax
import jax.numpy as jnp
from jax.experimental import pallas as pl
from jax.experimental.pallas import tpu as pltpu

LANES = 128
ACC_ROWS = 32                       # accumulator height: 4 f32 vregs -> 4 add chains
NUM_CORES = 2                       # leading "parallel" axis (2 TCs on v7x)
TARGET_BLOCK_BYTES = 4 * 1024 * 1024  # ~4 MiB of input per operand per grid step


def _round_up(a, b):
    return pl.cdiv(a, b) * b


def _mask_mse_kernel(x_ref, y_ref, sum_ref, cnt_ref, *, block_rows):
    i = pl.program_id(1)

    @pl.when(i == 0)
    def _init():
        sum_ref[...] = jnp.zeros_like(sum_ref)
        cnt_ref[...] = jnp.zeros_like(cnt_ref)

    x = x_ref[...].astype(jnp.float32)
    y = y_ref[...].astype(jnp.float32)

    # Value-based mask only.  Wrapper zero-padding is excluded here because
    # padded elements have x == 0 and y == 0.  No index / tail mask needed.
    mask = (x != 0.0) & (y != 0.0) & (jnp.abs(x) <= 1.0) & (jnp.abs(y) <= 1.0)
    diff = x - y
    se = jnp.where(mask, diff * diff, 0.0)
    maskf = jnp.where(mask, 1.0, 0.0)

    # Partial reduction (block_rows, 128) -> (32, 128): pure VPU vreg adds over
    # 4 independent accumulator vregs; no per-step cross-lane XLU reduction.
    groups = block_rows // ACC_ROWS
    sum_ref[0] += se.reshape(groups, ACC_ROWS, LANES).sum(axis=0)
    cnt_ref[0] += maskf.reshape(groups, ACC_ROWS, LANES).sum(axis=0)


def mask_mse(input_arr, target_arr):
    """Masked MSE over arbitrary-shaped (matching) input/target arrays."""
    assert input_arr.shape == target_arr.shape
    x = input_arr.reshape(-1)
    y = target_arr.reshape(-1)
    n = x.shape[0]

    # Dtype-aware block sizing: keep ~TARGET_BLOCK_BYTES per operand per step.
    itemsize = input_arr.dtype.itemsize
    max_block_rows = max(ACC_ROWS, (TARGET_BLOCK_BYTES // itemsize) // LANES)
    max_block_rows = _round_up(max_block_rows, ACC_ROWS)

    rows_needed = pl.cdiv(n, LANES)
    rows_per_core = pl.cdiv(rows_needed, NUM_CORES)
    block_rows = min(max_block_rows, _round_up(max(rows_per_core, 1), ACC_ROWS))
    blocks_per_core = pl.cdiv(max(rows_per_core, 1), block_rows)
    rows_padded = NUM_CORES * blocks_per_core * block_rows
    n_padded = rows_padded * LANES

    # Zero padding: padded elements fail the value mask (x == 0 & y == 0),
    # so they contribute nothing to either the sum or the count.
    if n_padded != n:
        x = jnp.pad(x, (0, n_padded - n))
        y = jnp.pad(y, (0, n_padded - n))

    x2 = x.reshape(rows_padded, LANES)
    y2 = y.reshape(rows_padded, LANES)

    kernel = functools.partial(_mask_mse_kernel, block_rows=block_rows)
    in_map = lambda c, i: (c * blocks_per_core + i, 0)
    out_map = lambda c, i: (c, 0, 0)

    sums, cnts = pl.pallas_call(
        kernel,
        out_shape=(
            jax.ShapeDtypeStruct((NUM_CORES, ACC_ROWS, LANES), jnp.float32),
            jax.ShapeDtypeStruct((NUM_CORES, ACC_ROWS, LANES), jnp.float32),
        ),
        grid_spec=pltpu.PrefetchScalarGridSpec(
            num_scalar_prefetch=0,
            grid=(NUM_CORES, blocks_per_core),
            in_specs=[
                pl.BlockSpec((block_rows, LANES), in_map),
                pl.BlockSpec((block_rows, LANES), in_map),
            ],
            out_specs=(
                pl.BlockSpec((1, ACC_ROWS, LANES), out_map),
                pl.BlockSpec((1, ACC_ROWS, LANES), out_map),
            ),
        ),
        compiler_params=pltpu.CompilerParams(
            dimension_semantics=("parallel", "arbitrary"),
            vmem_limit_bytes=32 * 1024 * 1024,
        ),
    )(x2, y2)

    total = jnp.sum(sums)
    count = jnp.sum(cnts)
    # 0 / 0 -> NaN, matching torch.mean over an empty selection.
    return total / count


def _reference_mask_mse(input_arr, target_arr):
    x = input_arr.reshape(-1).astype(jnp.float32)
    y = target_arr.reshape(-1).astype(jnp.float32)
    se = (x - y) ** 2
    mask = (x != 0) & (y != 0) & (jnp.abs(x) <= 1) & (jnp.abs(y) <= 1)
    cnt = jnp.sum(mask.astype(jnp.float32))
    return jnp.sum(jnp.where(mask, se, 0.0)) / cnt


if __name__ == "__main__":
    key = jax.random.PRNGKey(0)
    k1, k2, k3, k4, k5 = jax.random.split(key, 5)

    # Main test: NCHW flow-like tensor, values straddling [-1, 1] plus some
    # exact zeros so every mask rule is exercised.
    B, C, H, W = 2, 4, 16, 16
    inp = jax.random.uniform(k1, (B, C, H, W), minval=-1.2, maxval=1.2)
    tgt = jax.random.uniform(k2, (B, C, H, W), minval=-1.2, maxval=1.2)
    zero_mask = jax.random.bernoulli(k3, p=0.05, shape=(B, C, H, W))
    inp = jnp.where(zero_mask, 0.0, inp).astype(jnp.float32)
    tgt = tgt.astype(jnp.float32)

    result = mask_mse(inp, tgt)
    jax.block_until_ready(result)
    expected = _reference_mask_mse(inp, tgt)
    assert jnp.allclose(result, expected, rtol=1e-5, atol=1e-6), (result, expected)

    # Secondary test: ragged size (not a multiple of 128*blocks) exercising
    # the wrapper zero-padding path (pads are rejected by the value mask).
    inp2 = jax.random.uniform(k4, (3, 5, 7, 11), minval=-1.2, maxval=1.2)
    tgt2 = jax.random.uniform(k5, (3, 5, 7, 11), minval=-1.2, maxval=1.2)
    result2 = mask_mse(inp2, tgt2)
    jax.block_until_ready(result2)
    expected2 = _reference_mask_mse(inp2, tgt2)
    assert jnp.allclose(result2, expected2, rtol=1e-5, atol=1e-6), (result2, expected2)

    print("KERNEL_OK")
</pallas_src>

<mosaic_0001>
module attributes {stable_mosaic.version = 11 : i64} {
  func.func @_mask_mse_kernel(%arg0: i32, %arg1: i32, %arg2: memref<32x128xf32, #tpu.memory_space<vmem>>, %arg3: memref<32x128xf32, #tpu.memory_space<vmem>>, %arg4: memref<1x32x128xf32, #tpu.memory_space<vmem>>, %arg5: memref<1x32x128xf32, #tpu.memory_space<vmem>>) attributes {dimension_semantics = [#tpu.dimension_semantics<parallel>, #tpu.dimension_semantics<arbitrary>], iteration_bounds = array<i64: 2, 1>, scalar_prefetch = 0 : i64, scratch_operands = 0 : i64, tpu.core_type = #tpu.core_type<tc>, window_params = [{transform_indices = @transform_0, window_bounds = array<i64: 32, 128>}, {transform_indices = @transform_1, window_bounds = array<i64: 32, 128>}, {transform_indices = @transform_2, window_bounds = array<i64: 1, 32, 128>}, {transform_indices = @transform_3, window_bounds = array<i64: 1, 32, 128>}]} {
    %c0_i32 = arith.constant 0 : i32
    %0 = arith.cmpi eq, %arg1, %c0_i32 : i32
    %1 = arith.extui %0 : i1 to i32
    %c0_i32_0 = arith.constant 0 : i32
    %2 = arith.cmpi ne, %1, %c0_i32_0 : i32
    scf.if %2 {
      %cst_24 = arith.constant 0.000000e+00 : f32
      %41 = vector.broadcast %cst_24 : f32 to vector<1x32x128xf32>
      %c0_25 = arith.constant 0 : index
      %c0_26 = arith.constant 0 : index
      %c0_27 = arith.constant 0 : index
      %42 = vector.load %arg4[%c0_25, %c0_26, %c0_27] : memref<1x32x128xf32, #tpu.memory_space<vmem>>, vector<1x32x128xf32>
      tpu.vector_store %arg4[%c0_25, %c0_26, %c0_27], %41 {strides = array<i32>} : memref<1x32x128xf32, #tpu.memory_space<vmem>>, vector<1x32x128xf32>,
      %cst_28 = arith.constant 0.000000e+00 : f32
      %43 = vector.broadcast %cst_28 : f32 to vector<1x32x128xf32>
      %c0_29 = arith.constant 0 : index
      %c0_30 = arith.constant 0 : index
      %c0_31 = arith.constant 0 : index
      %44 = vector.load %arg5[%c0_29, %c0_30, %c0_31] : memref<1x32x128xf32, #tpu.memory_space<vmem>>, vector<1x32x128xf32>
      tpu.vector_store %arg5[%c0_29, %c0_30, %c0_31], %43 {strides = array<i32>} : memref<1x32x128xf32, #tpu.memory_space<vmem>>, vector<1x32x128xf32>,
    } else {
    }
    %c0 = arith.constant 0 : index
    %c0_1 = arith.constant 0 : index
    %3 = vector.load %arg2[%c0, %c0_1] : memref<32x128xf32, #tpu.memory_space<vmem>>, vector<32x128xf32>
    %c0_2 = arith.constant 0 : index
    %c0_3 = arith.constant 0 : index
    %4 = vector.load %arg3[%c0_2, %c0_3] : memref<32x128xf32, #tpu.memory_space<vmem>>, vector<32x128xf32>
    %cst = arith.constant 0.000000e+00 : f32
    %5 = vector.broadcast %cst : f32 to vector<32x128xf32>
    %6 = arith.cmpf one, %3, %5 : vector<32x128xf32>
    %cst_4 = arith.constant 0.000000e+00 : f32
    %7 = vector.broadcast %cst_4 : f32 to vector<32x128xf32>
    %8 = arith.cmpf one, %4, %7 : vector<32x128xf32>
    %9 = arith.andi %6, %8 : vector<32x128xi1>
    %10 = math.absf %3 : vector<32x128xf32>
    %cst_5 = arith.constant 1.000000e+00 : f32
    %11 = vector.broadcast %cst_5 : f32 to vector<32x128xf32>
    %12 = arith.cmpf ole, %10, %11 : vector<32x128xf32>
    %13 = arith.andi %9, %12 : vector<32x128xi1>
    %14 = math.absf %4 : vector<32x128xf32>
    %cst_6 = arith.constant 1.000000e+00 : f32
    %15 = vector.broadcast %cst_6 : f32 to vector<32x128xf32>
    %16 = arith.cmpf ole, %14, %15 : vector<32x128xf32>
    %17 = arith.andi %13, %16 : vector<32x128xi1>
    %18 = arith.subf %3, %4 : vector<32x128xf32>
    %19 = arith.mulf %18, %18 : vector<32x128xf32>
    %cst_7 = arith.constant 0.000000e+00 : f32
    %20 = vector.broadcast %cst_7 : f32 to vector<32x128xf32>
    %21 = arith.select %17, %19, %20 : vector<32x128xi1>, vector<32x128xf32>
    %cst_8 = arith.constant 1.000000e+00 : f32
    %cst_9 = arith.constant 0.000000e+00 : f32
    %22 = vector.broadcast %cst_8 : f32 to vector<32x128xf32>
    %23 = vector.broadcast %cst_9 : f32 to vector<32x128xf32>
    %24 = arith.select %17, %22, %23 : vector<32x128xi1>, vector<32x128xf32>
    %c0_10 = arith.constant 0 : index
    %c0_11 = arith.constant 0 : index
    %c0_12 = arith.constant 0 : index
    %25 = vector.load %arg4[%c0_10, %c0_11, %c0_12] : memref<1x32x128xf32, #tpu.memory_space<vmem>>, vector<1x32x128xf32>
    %26 = vector.shape_cast %25 : vector<1x32x128xf32> to vector<32x128xf32>
    %27 = vector.shape_cast %21 : vector<32x128xf32> to vector<1x32x128xf32>
    %cst_13 = arith.constant dense<0.000000e+00> : vector<32x128xf32>
    %28 = vector.multi_reduction <add>, %27, %cst_13 [0] : vector<1x32x128xf32> to vector<32x128xf32>
    %29 = arith.addf %26, %28 : vector<32x128xf32>
    %c0_14 = arith.constant 0 : index
    %c0_15 = arith.constant 0 : index
    %c0_16 = arith.constant 0 : index
    %30 = vector.load %arg4[%c0_14, %c0_15, %c0_16] : memref<1x32x128xf32, #tpu.memory_space<vmem>>, vector<1x32x128xf32>
    %31 = vector.shape_cast %30 : vector<1x32x128xf32> to vector<32x128xf32>
    %32 = vector.shape_cast %29 : vector<32x128xf32> to vector<1x32x128xf32>
    tpu.vector_store %arg4[%c0_14, %c0_15, %c0_16], %32 {strides = array<i32>} : memref<1x32x128xf32, #tpu.memory_space<vmem>>, vector<1x32x128xf32>,
    %c0_17 = arith.constant 0 : index
    %c0_18 = arith.constant 0 : index
    %c0_19 = arith.constant 0 : index
    %33 = vector.load %arg5[%c0_17, %c0_18, %c0_19] : memref<1x32x128xf32, #tpu.memory_space<vmem>>, vector<1x32x128xf32>
    %34 = vector.shape_cast %33 : vector<1x32x128xf32> to vector<32x128xf32>
    %35 = vector.shape_cast %24 : vector<32x128xf32> to vector<1x32x128xf32>
    %cst_20 = arith.constant dense<0.000000e+00> : vector<32x128xf32>
    %36 = vector.multi_reduction <add>, %35, %cst_20 [0] : vector<1x32x128xf32> to vector<32x128xf32>
    %37 = arith.addf %34, %36 : vector<32x128xf32>
    %c0_21 = arith.constant 0 : index
    %c0_22 = arith.constant 0 : index
    %c0_23 = arith.constant 0 : index
    %38 = vector.load %arg5[%c0_21, %c0_22, %c0_23] : memref<1x32x128xf32, #tpu.memory_space<vmem>>, vector<1x32x128xf32>
    %39 = vector.shape_cast %38 : vector<1x32x128xf32> to vector<32x128xf32>
    %40 = vector.shape_cast %37 : vector<32x128xf32> to vector<1x32x128xf32>
    tpu.vector_store %arg5[%c0_21, %c0_22, %c0_23], %40 {strides = array<i32>} : memref<1x32x128xf32, #tpu.memory_space<vmem>>, vector<1x32x128xf32>,
    return
  }
  func.func @transform_0(%arg0: i32, %arg1: i32) -> (i32, i32) {
    %c1_i32 = arith.constant 1 : i32
    %0 = arith.muli %arg0, %c1_i32 : i32
    %1 = arith.addi %0, %arg1 : i32
    %c0_i32 = arith.constant 0 : i32
    %c0_i32_0 = arith.constant 0 : i32
    return %1, %c0_i32 : i32, i32
  }
  func.func @transform_1(%arg0: i32, %arg1: i32) -> (i32, i32) {
    %c1_i32 = arith.constant 1 : i32
    %0 = arith.muli %arg0, %c1_i32 : i32
    %1 = arith.addi %0, %arg1 : i32
    %c0_i32 = arith.constant 0 : i32
    %c0_i32_0 = arith.constant 0 : i32
    return %1, %c0_i32 : i32, i32
  }
  func.func @transform_2(%arg0: i32, %arg1: i32) -> (i32, i32, i32) {
    %c0_i32 = arith.constant 0 : i32
    %c0_i32_0 = arith.constant 0 : i32
    %c0_i32_1 = arith.constant 0 : i32
    return %arg0, %c0_i32, %c0_i32_0 : i32, i32, i32
  }
  func.func @transform_3(%arg0: i32, %arg1: i32) -> (i32, i32, i32) {
    %c0_i32 = arith.constant 0 : i32
    %c0_i32_0 = arith.constant 0 : i32
    %c0_i32_1 = arith.constant 0 : i32
    return %arg0, %c0_i32, %c0_i32_0 : i32, i32, i32
  }
}

</mosaic_0001>

<llo_original>
// kernel: tpu_custom_call.1
$region0: #{tpu_custom_call.1}
  #allocation0 [shape = 'u32[]', space=smem, size = 0x4, offset = 0x4, fixed_abs, tag = 'smem constant byte address 0x4 - core index']
  #allocation1 [shape = 'u32[72,128]{1,0:T(1,128)}', space=vmem, size = 0x9000, scoped, tag = 'internal scratch']
  %s0 = inlined_call_operand.hbm [shape: f32[64,128], index: 0, kind: input, shape index: {}]
  %s1 = inlined_call_operand.hbm [shape: f32[64,128], index: 1, kind: input, shape index: {}]
  %s2 = inlined_call_operand.hbm [shape: f32[2,32,128], index: 2, kind: output, shape index: {0}]
  %s3 = inlined_call_operand.hbm [shape: f32[2,32,128], index: 3, kind: output, shape index: {1}]
  %4 = xla_tuple %s2, %s3
  %s5 = sld [smem:[#allocation0]]
  $region61: #{tpu_custom_call.1} parent=0
    _
  %s7 = ssub.s32 1, %s5
  %s8 = scalar_select 0, %s7, %s5
  $region1: #{tpu_custom_call.1} parent=0
    #allocation2 [shape = 'u8[32768]{0}', space=vmem, size = 0x8000, scoped, tag = 'input window, operand 0']
    #allocation3 [shape = 's32[2]{0}', space=sflag, size = 0x8, scoped, tag = 'scoped memory for tpu_custom_call.1']
    #allocation4 [shape = 's32[2]{0}', space=sflag, size = 0x8, scoped, tag = 'scoped memory for tpu_custom_call.1']
    #allocation5 [shape = 'u8[32768]{0}', space=vmem, size = 0x8000, scoped, tag = 'input window, operand 1']
    #allocation6 [shape = 's32[2]{0}', space=sflag, size = 0x8, scoped, tag = 'scoped memory for tpu_custom_call.1']
    #allocation7 [shape = 'u8[32768]{0}', space=vmem, size = 0x8000, scoped, tag = 'output window, operand 0']
    #allocation8 [shape = 'u8[32768]{0}', space=vmem, size = 0x8000, scoped, tag = 'output window, operand 1']
    #allocation9 [shape = 's32[2]{0}', space=sflag, size = 0x8, scoped, tag = 'scoped memory for tpu_custom_call.1']
    %9 = vsyncpa [#allocation3], 0
    %s10 = scalar_lea.sflag [#allocation3], 1
    %11 = vsyncpa %s10, 0
    %12 = vsyncpa [#allocation6], 0
    %s13 = scalar_lea.sflag [#allocation6], 1
    %14 = vsyncpa %s13, 0
    %15 = vsyncpa [#allocation4], 0
    %s16 = scalar_lea.sflag [#allocation4], 1
    %17 = vsyncpa %s16, 0
    %18 = vsyncpa [#allocation9], 0
    %s19 = scalar_lea.sflag [#allocation9], 1
    %20 = vsyncpa %s19, 0
    loop: start=0, step=1, limit=4
    $region2: #{tpu_custom_call.1} parent=1 // loop_pre_header
      _
    $region3: #{tpu_custom_call.1} parent=1 // loop_header
      %s22 = sphi 0, %s26
      %p23 = scmp.ge.s32.totalorder %s22, 4
      %s29 = sphi 0, %s41
      %s30 = sphi 0, %s37
      %s31 = sphi 0, %s29
      %s32 = sphi 0, %s30
      %s33 = sphi 0, %s31
      %s34 = sphi 0, %s32
      %s46 = sphi 0, %s48
      %s49 = sphi 0, %s46
      %s50 = sphi 0, %s49
      %s66 = sphi 0, %s50
      %s74 = sphi 0, %s76
      %s77 = sphi 0, %s74
      %s78 = sphi 0, %s77
      %s94 = sphi 0, %s78
      %s100 = sphi 0, %s102
      %s103 = sphi 0, %s100
      %s104 = sphi 0, %s103
      %s120 = sphi 0, %s104
      %s126 = sphi 0, %s128
      %s129 = sphi 0, %s126
      %s130 = sphi 0, %s129
      %s146 = sphi 0, %s130
    $region4: #{tpu_custom_call.1} parent=1 // loop_header_branch
      %25 = sbr.rel (%p23) target = $region8
    $region5: #{tpu_custom_call.1} parent=1 // loop_body
      %s27 = ssub.s32 %s22, 1
      %s28 = ssub.s32 %s22, 2
      %s35 = sadd.s32 1, %s30
      %p36 = scmp.ge.s32.totalorder %s35, 1
      %s37 = scalar_select %p36, 0, %s35
      %s38 = sadd.s32 1, %s29
      %s39 = scalar_select %p36, %s38, %s29
      %p40 = scmp.ge.s32.totalorder %s39, 2
      %s41 = scalar_select %p40, 0, %s39
      %s42 = sadd.s32 %s29, %s30
      %s43 = sadd.s32 %s41, %s37
      %s44 = ssub.s32 %s42, %s43
      %p45 = scmp.eq.s32.totalorder %s44, 0
      %s47 = sadd.s32 %s46, 1
      %s48 = scalar_select %p45, %s46, %s47
      %p51 = pneg %p45
      %p52 = scmp.eq.s32.totalorder %s22, 1
      %p53 = por %p51, %p52
      %p54 = scmp.ne.s32.totalorder %s46, %s49
      %p55 = scmp.eq.s32.totalorder %s22, 0
      %p56 = por %p54, %p55
      %p57 = scmp.ne.s32.totalorder %s46, %s49
      %p58 = scmp.eq.s32.totalorder %s27, 1
      %p59 = por %p57, %p58
      %p60 = scmp.ne.s32.totalorder %s49, %s50
      %p61 = scmp.eq.s32.totalorder %s27, 0
      %p62 = por %p60, %p61
      %p63 = scmp.ne.s32.totalorder %s49, %s50
      %p64 = scmp.eq.s32.totalorder %s28, 1
      %p65 = por %p63, %p64
      %p67 = scmp.ne.s32.totalorder %s50, %s66
      %p68 = scmp.eq.s32.totalorder %s28, 0
      %p69 = por %p67, %p68
      %s70 = sadd.s32 %s29, %s30
      %s71 = sadd.s32 %s41, %s37
      %s72 = ssub.s32 %s70, %s71
      %p73 = scmp.eq.s32.totalorder %s72, 0
      %s75 = sadd.s32 %s74, 1
      %s76 = scalar_select %p73, %s74, %s75
      %p79 = pneg %p73
      %p80 = scmp.eq.s32.totalorder %s22, 1
      %p81 = por %p79, %p80
      %p82 = scmp.ne.s32.totalorder %s74, %s77
      %p83 = scmp.eq.s32.totalorder %s22, 0
      %p84 = por %p82, %p83
      %p85 = scmp.ne.s32.totalorder %s74, %s77
      %p86 = scmp.eq.s32.totalorder %s27, 1
      %p87 = por %p85, %p86
      %p88 = scmp.ne.s32.totalorder %s77, %s78
      %p89 = scmp.eq.s32.totalorder %s27, 0
      %p90 = por %p88, %p89
      %p91 = scmp.ne.s32.totalorder %s77, %s78
      %p92 = scmp.eq.s32.totalorder %s28, 1
      %p93 = por %p91, %p92
      %p95 = scmp.ne.s32.totalorder %s78, %s94
      %p96 = scmp.eq.s32.totalorder %s28, 0
      %p97 = por %p95, %p96
      %s98 = ssub.s32 %s29, %s41
      %p99 = scmp.eq.s32.totalorder %s98, 0
      %s101 = sadd.s32 %s100, 1
      %s102 = scalar_select %p99, %s100, %s101
      %p105 = pneg %p99
      %p106 = scmp.eq.s32.totalorder %s22, 1
      %p107 = por %p105, %p106
      %p108 = scmp.ne.s32.totalorder %s100, %s103
      %p109 = scmp.eq.s32.totalorder %s22, 0
      %p110 = por %p108, %p109
      %p111 = scmp.ne.s32.totalorder %s100, %s103
      %p112 = scmp.eq.s32.totalorder %s27, 1
      %p113 = por %p111, %p112
      %p114 = scmp.ne.s32.totalorder %s103, %s104
      %p115 = scmp.eq.s32.totalorder %s27, 0
      %p116 = por %p114, %p115
      %p117 = scmp.ne.s32.totalorder %s103, %s104
      %p118 = scmp.eq.s32.totalorder %s28, 1
      %p119 = por %p117, %p118
      %p121 = scmp.ne.s32.totalorder %s104, %s120
      %p122 = scmp.eq.s32.totalorder %s28, 0
      %p123 = por %p121, %p122
      %s124 = ssub.s32 %s29, %s41
      %p125 = scmp.eq.s32.totalorder %s124, 0
      %s127 = sadd.s32 %s126, 1
      %s128 = scalar_select %p125, %s126, %s127
      %p131 = pneg %p125
      %p132 = scmp.eq.s32.totalorder %s22, 1
      %p133 = por %p131, %p132
      %p134 = scmp.ne.s32.totalorder %s126, %s129
      %p135 = scmp.eq.s32.totalorder %s22, 0
      %p136 = por %p134, %p135
      %p137 = scmp.ne.s32.totalorder %s126, %s129
      %p138 = scmp.eq.s32.totalorder %s27, 1
      %p139 = por %p137, %p138
      %p140 = scmp.ne.s32.totalorder %s129, %s130
      %p141 = scmp.eq.s32.totalorder %s27, 0
      %p142 = por %p140, %p141
      %p143 = scmp.ne.s32.totalorder %s129, %s130
      %p144 = scmp.eq.s32.totalorder %s28, 1
      %p145 = por %p143, %p144
      %p147 = scmp.ne.s32.totalorder %s130, %s146
      %p148 = scmp.eq.s32.totalorder %s28, 0
      %p149 = por %p147, %p148
      %p150 = scmp.le.s32.totalorder 1, %s22
      %p151 = scmp.lt.s32.totalorder %s22, 3
      %p152 = pnand %p150, %p151
      %p153 = pneg %p152
      // Predicated region
      $region9: #{tpu_custom_call.1} parent=5 // pred_check
        _
      $region10: #{tpu_custom_call.1} parent=5 // pred_check_branch
        %155 = sbr.rel (%p152) target = $region12
      $region11: #{tpu_custom_call.1} parent=5 // pred_region
        %s156 = ssub.s32 %s22, 1
      $region12: #{tpu_custom_call.1} parent=5 // pred_fallthru
        _
      %p157 = scmp.lt.s32.totalorder %s22, 2
      // Predicated region
      $region13: #{tpu_custom_call.1} parent=5 // pred_check
        %p158 = pneg %p157
      $region14: #{tpu_custom_call.1} parent=5 // pred_check_branch
        %160 = sbr.rel (%p158) target = $region16
      $region15: #{tpu_custom_call.1} parent=5 // pred_region
        // Predicated region
        $region17: #{tpu_custom_call.1} parent=15 // pred_check
          %p161 = pneg %p56
        $region18: #{tpu_custom_call.1} parent=15 // pred_check_branch
          %163 = sbr.rel (%p161) target = $region20
        $region19: #{tpu_custom_call.1} parent=15 // pred_region
          %s164 = sand.u32 %s46, 1
          %s165 = scalar_lea.sflag [#allocation3], %s164
          %s166 = sand.u32 %s46, 1
          %s167 = smul.addr %s166, 32
          %s168 = scalar_lea.vmem [#allocation2], %s167
          %s169 = sadd.s32 %s29, %s30
          %s170 = smul.u32 4, %s169
          %172 = vsyncadd %s165, 0
          %s173 = smul.addr %s170, 8
          %s174 = scalar_lea.hbm %s0, %s173
          %s175 = sshll.u32 %s174, 4
          %s176 = int_to_ptr.hbm [resolvable:$true] %s175
          %s177 = sshll.u32 %s168, 4
          %s178 = int_to_ptr.vmem [resolvable:$true] %s177
          %183 = dma.hbm_to_vmem [thread:$0]  %s176, 512, %s178, %s165, 128, 128, 8
        $region20: #{tpu_custom_call.1} parent=15 // pred_fallthru
          _
        // Predicated region
        $region21: #{tpu_custom_call.1} parent=15 // pred_check
          %p184 = pneg %p84
        $region22: #{tpu_custom_call.1} parent=15 // pred_check_branch
          %186 = sbr.rel (%p184) target = $region24
        $region23: #{tpu_custom_call.1} parent=15 // pred_region
          %s187 = sand.u32 %s74, 1
          %s188 = scalar_lea.sflag [#allocation6], %s187
          %s189 = sand.u32 %s74, 1
          %s190 = smul.addr %s189, 32
          %s191 = scalar_lea.vmem [#allocation5], %s190
          %s192 = sadd.s32 %s29, %s30
          %s193 = smul.u32 4, %s192
          %195 = vsyncadd %s188, 0
          %s196 = smul.addr %s193, 8
          %s197 = scalar_lea.hbm %s1, %s196
          %s198 = sshll.u32 %s197, 4
          %s199 = int_to_ptr.hbm [resolvable:$true] %s198
          %s200 = sshll.u32 %s191, 4
          %s201 = int_to_ptr.vmem [resolvable:$true] %s200
          %206 = dma.hbm_to_vmem [thread:$0]  %s199, 512, %s201, %s188, 128, 128, 8
        $region24: #{tpu_custom_call.1} parent=15 // pred_fallthru
          _
      $region16: #{tpu_custom_call.1} parent=5 // pred_fallthru
        _
      %p207 = scmp.le.s32.totalorder 1, %s22
      %p208 = scmp.lt.s32.totalorder %s22, 3
      %p209 = pnand %p207, %p208
      %p210 = pneg %p209
      // Predicated region
      $region25: #{tpu_custom_call.1} parent=5 // pred_check
        _
      $region26: #{tpu_custom_call.1} parent=5 // pred_check_branch
        %212 = sbr.rel (%p209) target = $region28
      $region27: #{tpu_custom_call.1} parent=5 // pred_region
        %s213 = ssub.s32 %s22, 1
        %s214 = sand.u32 %s49, 1
        %s215 = scalar_lea.sflag [#allocation3], %s214
        %s216 = sand.u32 %s49, 1
        %s217 = smul.addr %s216, 32
        %s218 = scalar_lea.vmem [#allocation2], %s217
        // Predicated region
        $region29: #{tpu_custom_call.1} parent=27 // pred_check
          %p219 = pneg %p62
        $region30: #{tpu_custom_call.1} parent=27 // pred_check_branch
          %221 = sbr.rel (%p219) target = $region32
        $region31: #{tpu_custom_call.1} parent=27 // pred_region
          %223 = dma.done %s215, 512
        $region32: #{tpu_custom_call.1} parent=27 // pred_fallthru
          _
        %s224 = sand.u32 %s77, 1
        %s225 = scalar_lea.sflag [#allocation6], %s224
        %s226 = sand.u32 %s77, 1
        %s227 = smul.addr %s226, 32
        %s228 = scalar_lea.vmem [#allocation5], %s227
        // Predicated region
        $region33: #{tpu_custom_call.1} parent=27 // pred_check
          %p229 = pneg %p90
        $region34: #{tpu_custom_call.1} parent=27 // pred_check_branch
          %231 = sbr.rel (%p229) target = $region36
        $region35: #{tpu_custom_call.1} parent=27 // pred_region
          %233 = dma.done %s225, 512
        $region36: #{tpu_custom_call.1} parent=27 // pred_fallthru
          _
        %s234 = sand.u32 %s49, 1
        %s235 = scalar_lea.sflag [#allocation3], %s234
        %s236 = sand.u32 %s49, 1
        %s237 = smul.addr %s236, 32
        %s238 = scalar_lea.vmem [#allocation2], %s237
        %p239 = pneg %p62
        %p240 = pneg %p59
        %s241 = sand.u32 %s77, 1
        %s242 = scalar_lea.sflag [#allocation6], %s241
        %s243 = sand.u32 %s77, 1
        %s244 = smul.addr %s243, 32
        %s245 = scalar_lea.vmem [#allocation5], %s244
        %p246 = pneg %p90
        %p247 = pneg %p87
        %p248 = pneg %p116
        %p249 = pneg %p113
        %s250 = sand.u32 %s103, 1
        %s251 = scalar_lea.sflag [#allocation4], %s250
        %s252 = sand.u32 %s103, 1
        %s253 = smul.addr %s252, 32
        %s254 = scalar_lea.vmem [#allocation7], %s253
        %p255 = pneg %p142
        %p256 = pneg %p139
        %s257 = sand.u32 %s129, 1
        %s258 = scalar_lea.sflag [#allocation9], %s257
        %s259 = sand.u32 %s129, 1
        %s260 = smul.addr %s259, 32
        %s261 = scalar_lea.vmem [#allocation8], %s260
        %s262 = sadd.s32 %s31, %s32
        %s263 = smul.u32 4, %s262
        %s264 = sadd.s32 %s31, %s32
        %s265 = smul.u32 4, %s264
        %p266 = scmp.eq.s32.totalorder %s32, 0
        // Predicated region
        $region37: #{tpu_custom_call.1} parent=27 // pred_check
          %p267 = pneg %p266
        $region38: #{tpu_custom_call.1} parent=27 // pred_check_branch
          %269 = sbr.rel (%p267) target = $region40
        $region39: #{tpu_custom_call.1} parent=27 // pred_region
          %270 = vst [vmem:[%s254] sm:$0xff] 0.0
          %271 = vst [vmem:[%s254 + $0x8] sm:$0xff] 0.0
          %272 = vst [vmem:[%s254 + $0x10] sm:$0xff] 0.0
          %273 = vst [vmem:[%s254 + $0x18] sm:$0xff] 0.0
          %274 = vst [vmem:[%s261] sm:$0xff] 0.0
          %275 = vst [vmem:[%s261 + $0x8] sm:$0xff] 0.0
          %276 = vst [vmem:[%s261 + $0x10] sm:$0xff] 0.0
          %277 = vst [vmem:[%s261 + $0x18] sm:$0xff] 0.0
        $region40: #{tpu_custom_call.1} parent=27 // pred_fallthru
          _
        %v278 = vld [vmem:[%s218] sm:$0xff]
        %v279 = vld [vmem:[%s218 + $0x8] sm:$0xff]
        %v280 = vld [vmem:[%s218 + $0x10] sm:$0xff]
        %v281 = vld [vmem:[%s218 + $0x18] sm:$0xff]
        %v282 = vld [vmem:[%s228] sm:$0xff]
        %v283 = vld [vmem:[%s228 + $0x8] sm:$0xff]
        %v284 = vld [vmem:[%s228 + $0x10] sm:$0xff]
        %v285 = vld [vmem:[%s228 + $0x18] sm:$0xff]
        %vm286 = vcmp.ne.f32.partialorder %v278, 0.0
        %vm287 = vcmp.ne.f32.partialorder %v279, 0.0
        %vm288 = vcmp.ne.f32.partialorder %v280, 0.0
        %vm289 = vcmp.ne.f32.partialorder %v281, 0.0
        %vm290 = vcmp.ne.f32.partialorder %v282, 0.0
        %vm291 = vcmp.ne.f32.partialorder %v283, 0.0
        %vm292 = vcmp.ne.f32.partialorder %v284, 0.0
        %vm293 = vcmp.ne.f32.partialorder %v285, 0.0
        %vm294 = vmand %vm286, %vm290
        %vm295 = vmand %vm287, %vm291
        %vm296 = vmand %vm288, %vm292
        %vm297 = vmand %vm289, %vm293
        %v298 = vand.u32 2147483647, %v278
        %v299 = vand.u32 2147483647, %v279
        %v300 = vand.u32 2147483647, %v280
        %v301 = vand.u32 2147483647, %v281
        %vm302 = vcmp.le.f32.partialorder %v298, 1.0
        %vm303 = vcmp.le.f32.partialorder %v299, 1.0
        %vm304 = vcmp.le.f32.partialorder %v300, 1.0
        %vm305 = vcmp.le.f32.partialorder %v301, 1.0
        %vm306 = vmand %vm294, %vm302
        %vm307 = vmand %vm295, %vm303
        %vm308 = vmand %vm296, %vm304
        %vm309 = vmand %vm297, %vm305
        %v310 = vand.u32 2147483647, %v282
        %v311 = vand.u32 2147483647, %v283
        %v312 = vand.u32 2147483647, %v284
        %v313 = vand.u32 2147483647, %v285
        %vm314 = vcmp.le.f32.partialorder %v310, 1.0
        %vm315 = vcmp.le.f32.partialorder %v311, 1.0
        %vm316 = vcmp.le.f32.partialorder %v312, 1.0
        %vm317 = vcmp.le.f32.partialorder %v313, 1.0
        %vm318 = vmand %vm306, %vm314
        %vm319 = vmand %vm307, %vm315
        %vm320 = vmand %vm308, %vm316
        %vm321 = vmand %vm309, %vm317
        %v322 = vsub.f32 %v278, %v282
        %v323 = vsub.f32 %v279, %v283
        %v324 = vsub.f32 %v280, %v284
        %v325 = vsub.f32 %v281, %v285
        %v326 = vmul.f32 %v322, %v322
        %v327 = vmul.f32 %v323, %v323
        %v328 = vmul.f32 %v324, %v324
        %v329 = vmul.f32 %v325, %v325
        %v330 = vsel %vm318, %v326, 0.0
        %v331 = vsel %vm319, %v327, 0.0
        %v332 = vsel %vm320, %v328, 0.0
        %v333 = vsel %vm321, %v329, 0.0
        %v334 = vsel %vm318, 1.0, 0.0
        %v335 = vsel %vm319, 1.0, 0.0
        %v336 = vsel %vm320, 1.0, 0.0
        %v337 = vsel %vm321, 1.0, 0.0
        %v338 = vld [vmem:[%s254] sm:$0xff]
        %v339 = vld [vmem:[%s254 + $0x8] sm:$0xff]
        %v340 = vld [vmem:[%s254 + $0x10] sm:$0xff]
        %v341 = vld [vmem:[%s254 + $0x18] sm:$0xff]
        %v342 = vadd.f32 %v330, 0.0
        %v343 = vadd.f32 %v331, 0.0
        %v344 = vadd.f32 %v332, 0.0
        %v345 = vadd.f32 %v333, 0.0
        %v346 = vadd.f32 %v338, %v342
        %v347 = vadd.f32 %v339, %v343
        %v348 = vadd.f32 %v340, %v344
        %v349 = vadd.f32 %v341, %v345
        %350 = vst [vmem:[%s254] sm:$0xff] %v346
        %351 = vst [vmem:[%s254 + $0x8] sm:$0xff] %v347
        %352 = vst [vmem:[%s254 + $0x10] sm:$0xff] %v348
        %353 = vst [vmem:[%s254 + $0x18] sm:$0xff] %v349
        %v354 = vld [vmem:[%s261] sm:$0xff]
        %v355 = vld [vmem:[%s261 + $0x8] sm:$0xff]
        %v356 = vld [vmem:[%s261 + $0x10] sm:$0xff]
        %v357 = vld [vmem:[%s261 + $0x18] sm:$0xff]
        %v358 = vadd.f32 %v334, 0.0
        %v359 = vadd.f32 %v335, 0.0
        %v360 = vadd.f32 %v336, 0.0
        %v361 = vadd.f32 %v337, 0.0
        %v362 = vadd.f32 %v354, %v358
        %v363 = vadd.f32 %v355, %v359
        %v364 = vadd.f32 %v356, %v360
        %v365 = vadd.f32 %v357, %v361
        %366 = vst [vmem:[%s261] sm:$0xff] %v362
        %367 = vst [vmem:[%s261 + $0x8] sm:$0xff] %v363
        %368 = vst [vmem:[%s261 + $0x10] sm:$0xff] %v364
        %369 = vst [vmem:[%s261 + $0x18] sm:$0xff] %v365
        %s370 = sand.u32 %s103, 1
        %s371 = scalar_lea.sflag [#allocation4], %s370
        %s372 = sand.u32 %s103, 1
        %s373 = smul.addr %s372, 32
        %s374 = scalar_lea.vmem [#allocation7], %s373
        %s375 = sand.u32 %s129, 1
        %s376 = scalar_lea.sflag [#allocation9], %s375
        %s377 = sand.u32 %s129, 1
        %s378 = smul.addr %s377, 32
        %s379 = scalar_lea.vmem [#allocation8], %s378
        // Predicated region
        $region41: #{tpu_custom_call.1} parent=27 // pred_check
          %p380 = pneg %p113
        $region42: #{tpu_custom_call.1} parent=27 // pred_check_branch
          %382 = sbr.rel (%p380) target = $region44
        $region43: #{tpu_custom_call.1} parent=27 // pred_region
          %384 = vsyncadd %s371, 0
          %s385 = smul.addr %s31, 4
          %s386 = smul.addr %s385, 8
          %s387 = scalar_lea.hbm %s2, %s386
          %s388 = sshll.u32 %s374, 4
          %s389 = int_to_ptr.vmem [resolvable:$true] %s388
          %s390 = sshll.u32 %s387, 4
          %s391 = int_to_ptr.hbm [resolvable:$true] %s390
          %396 = dma.vmem_to_hbm [thread:$0]  %s389, 512, %s391, %s371, 128, 128, 8
        $region44: #{tpu_custom_call.1} parent=27 // pred_fallthru
          _
        // Predicated region
        $region45: #{tpu_custom_call.1} parent=27 // pred_check
          %p397 = pneg %p139
        $region46: #{tpu_custom_call.1} parent=27 // pred_check_branch
          %399 = sbr.rel (%p397) target = $region48
        $region47: #{tpu_custom_call.1} parent=27 // pred_region
          %401 = vsyncadd %s376, 0
          %s402 = smul.addr %s31, 4
          %s403 = smul.addr %s402, 8
          %s404 = scalar_lea.hbm %s3, %s403
          %s405 = sshll.u32 %s379, 4
          %s406 = int_to_ptr.vmem [resolvable:$true] %s405
          %s407 = sshll.u32 %s404, 4
          %s408 = int_to_ptr.hbm [resolvable:$true] %s407
          %413 = dma.vmem_to_hbm [thread:$0]  %s406, 512, %s408, %s376, 128, 128, 8
        $region48: #{tpu_custom_call.1} parent=27 // pred_fallthru
          _
      $region28: #{tpu_custom_call.1} parent=5 // pred_fallthru
        _
      %p414 = scmp.le.s32.totalorder 2, %s22
      // Predicated region
      $region49: #{tpu_custom_call.1} parent=5 // pred_check
        %p415 = pneg %p414
      $region50: #{tpu_custom_call.1} parent=5 // pred_check_branch
        %417 = sbr.rel (%p415) target = $region52
      $region51: #{tpu_custom_call.1} parent=5 // pred_region
        %s418 = ssub.s32 %s22, 2
        // Predicated region
        $region53: #{tpu_custom_call.1} parent=51 // pred_check
          %p419 = pneg %p119
        $region54: #{tpu_custom_call.1} parent=51 // pred_check_branch
          %421 = sbr.rel (%p419) target = $region56
        $region55: #{tpu_custom_call.1} parent=51 // pred_region
          %s422 = sand.u32 %s104, 1
          %s423 = scalar_lea.sflag [#allocation4], %s422
          %s424 = sand.u32 %s104, 1
          %s425 = smul.addr %s424, 32
          %s426 = scalar_lea.vmem [#allocation7], %s425
          %428 = dma.done %s423, 512
        $region56: #{tpu_custom_call.1} parent=51 // pred_fallthru
          _
        // Predicated region
        $region57: #{tpu_custom_call.1} parent=51 // pred_check
          %p429 = pneg %p145
        $region58: #{tpu_custom_call.1} parent=51 // pred_check_branch
          %431 = sbr.rel (%p429) target = $region60
        $region59: #{tpu_custom_call.1} parent=51 // pred_region
          %s432 = sand.u32 %s130, 1
          %s433 = scalar_lea.sflag [#allocation9], %s432
          %s434 = sand.u32 %s130, 1
          %s435 = smul.addr %s434, 32
          %s436 = scalar_lea.vmem [#allocation8], %s435
          %438 = dma.done %s433, 512
        $region60: #{tpu_custom_call.1} parent=51 // pred_fallthru
          _
      $region52: #{tpu_custom_call.1} parent=5 // pred_fallthru
        _
    $region6: #{tpu_custom_call.1} parent=1 // loop_footer
      %s26 = sadd.s32 1, %s22
    $region7: #{tpu_custom_call.1} parent=1 // loop_footer_branch
      %21 = sbr.rel target = $region3
    $region8: #{tpu_custom_call.1} parent=1 // loop_exit
      _
    %439 = vsyncpa [#allocation3], 1
    %s440 = scalar_lea.sflag [#allocation3], 1
    %441 = vsyncpa %s440, 1
    %442 = vsyncpa [#allocation6], 1
    %s443 = scalar_lea.sflag [#allocation6], 1
    %444 = vsyncpa %s443, 1
    %445 = vsyncpa [#allocation4], 1
    %s446 = scalar_lea.sflag [#allocation4], 1
    %447 = vsyncpa %s446, 1
    %448 = vsyncpa [#allocation9], 1
    %s449 = scalar_lea.sflag [#allocation9], 1
    %450 = vsyncpa %s449, 1

</llo_original>
